<compile_context>
chip_gen: v7x
topology: tpu7x:2x2x1
jax: 0.10.0
libtpu: 0.0.40
codegen_flags: <defaults>
</compile_context>

<pallas_src>
import math

import jax
import jax.numpy as jnp
from jax import lax
from jax.experimental import pallas as pl
from jax.experimental.pallas import tpu as pltpu


# ---------------------------------------------------------------------------
# Kernel: TS timesteps of the batched LSTM cell + fc + tanh per grid step.
# ---------------------------------------------------------------------------
def _lstm_seq_kernel(gx_ref, h0_ref, c0_ref,
                     whh_ref, wfc_ref, bfc_ref,
                     y_ref, h_out_ref, c_out_ref):
    """Grid = (batch_block, time_chunk).

    gx_ref:  (TS, BB, 4*HP)  precomputed x-projection + biases for TS steps
    h_out_ref / c_out_ref have a constant block index along the time axis, so they
    stay resident in VMEM and double as the recurrent state between chunks.
    """
    TS, BB, _ = gx_ref.shape
    HP = h0_ref.shape[-1]          # padded hidden width (multiple of 128)
    OP = y_ref.shape[-1]           # padded output width (multiple of 128)
    ti = pl.program_id(1)

    # Initialize the VMEM-resident state from the provided hidden at the first chunk.
    @pl.when(ti == 0)
    def _():
        h_out_ref[...] = h0_ref[...]
        c_out_ref[...] = c0_ref[...]

    # Load weights / bias once per grid step (they are VMEM-resident across the grid,
    # constant index_map); hoist the bias broadcast out of the unrolled loop.
    whh = whh_ref[...]                                     # (HP, 4*HP)
    wfc = wfc_ref[...]                                     # (HP, OP)
    bfc = jnp.broadcast_to(bfc_ref[...], (BB, OP))         # (BB, OP)

    def sigmoid(z):
        # Exact identity; single EUP op instead of exp + divide.
        return 0.5 * jnp.tanh(0.5 * z) + 0.5

    def step(t, carry):
        h, c = carry
        # gates: (BB, 4*HP) = gates_x[t] + h @ Whh^T   (bias already folded into gates_x)
        gates = gx_ref[t] + jnp.dot(h, whh, preferred_element_type=jnp.float32)

        # PyTorch nn.LSTM gate order i, f, g, o; each block is a full 128-lane slab.
        i_g = sigmoid(gates[:, 0 * HP:1 * HP])
        f_g = sigmoid(gates[:, 1 * HP:2 * HP])
        g_g = jnp.tanh(gates[:, 2 * HP:3 * HP])
        o_g = sigmoid(gates[:, 3 * HP:4 * HP])

        c_new = f_g * c + i_g * g_g
        h_new = o_g * jnp.tanh(c_new)

        # fc + tanh output activation; lane-dense (BB, OP) store per timestep.
        y_ref[t] = jnp.tanh(
            jnp.dot(h_new, wfc, preferred_element_type=jnp.float32) + bfc)
        return h_new, c_new

    h_fin, c_fin = lax.fori_loop(0, TS, step,
                                 (h_out_ref[...], c_out_ref[...]),
                                 unroll=True)
    h_out_ref[...] = h_fin
    c_out_ref[...] = c_fin


# ---------------------------------------------------------------------------
# pallas_call wrapper (padded layout)
# ---------------------------------------------------------------------------
def _pick_block(n, cap):
    """Largest block <= cap that is a multiple of 8 and divides n; else n (full dim)."""
    if n <= cap:
        return n
    for cand in range(cap - cap % 8, 7, -8):
        if n % cand == 0:
            return cand
    return n


def _lstm_unroll_padded(gx, h0, c0, whh, wfc, bfc, *,
                        batch_block=None, time_block=None):
    """gx: (T, B, 4*HP) f32 precomputed x-projection (+bias); h0/c0: (B, HP) f32,
    zero-padded in the last HP-H lanes.  Returns ys (T, B, OP), hT (B, HP), cT (B, HP)."""
    T, B, G4 = gx.shape
    HP = whh.shape[0]
    OP = wfc.shape[1]
    assert G4 == 4 * HP

    # BB up to 256 fills MXU rows on v6e/v7x (128 is already full on v5e).
    # For v7x megacore, pass batch_block <= B/2 so the "parallel" axis has >=2 blocks.
    BB = _pick_block(B, 256) if batch_block is None else batch_block
    TS = _pick_block(T, 8) if time_block is None else time_block
    assert B % BB == 0 and T % TS == 0

    const = lambda bi, ti: (0, 0)   # weights: resident across the whole grid

    return pl.pallas_call(
        _lstm_seq_kernel,
        out_shape=(
            jax.ShapeDtypeStruct((T, B, OP), jnp.float32),
            jax.ShapeDtypeStruct((B, HP), jnp.float32),
            jax.ShapeDtypeStruct((B, HP), jnp.float32),
        ),
        grid=(B // BB, T // TS),
        in_specs=[
            pl.BlockSpec((TS, BB, G4), lambda bi, ti: (ti, bi, 0)),  # gates_x chunk
            pl.BlockSpec((BB, HP), lambda bi, ti: (bi, 0)),          # h0
            pl.BlockSpec((BB, HP), lambda bi, ti: (bi, 0)),          # c0
            pl.BlockSpec((HP, G4), const),                           # W_hh^T (gate-padded)
            pl.BlockSpec((HP, OP), const),                           # W_fc^T
            pl.BlockSpec((1, OP), const),                            # b_fc
        ],
        out_specs=(
            pl.BlockSpec((TS, BB, OP), lambda bi, ti: (ti, bi, 0)),  # y chunk (lane-dense)
            pl.BlockSpec((BB, HP), lambda bi, ti: (bi, 0)),          # h state / final h
            pl.BlockSpec((BB, HP), lambda bi, ti: (bi, 0)),          # c state / final c
        ),
        compiler_params=pltpu.CompilerParams(
            dimension_semantics=("parallel", "arbitrary")),
    )(gx, h0, c0, whh, wfc, bfc)


def _project_inputs(xs, wih, b):
    """Hoisted input projection: one big lane-dense matmul over all T*B rows.

    xs: (T, B, D) -> gates_x: (T, B, 4*HP) = xs @ W_ih^T + (b_ih + b_hh)."""
    T, B, D = xs.shape
    G4 = wih.shape[1]
    gx = jnp.dot(xs.reshape(T * B, D).astype(jnp.float32), wih,
                 preferred_element_type=jnp.float32) + b
    return gx.reshape(T, B, G4)


# ---------------------------------------------------------------------------
# Parameter packing (PyTorch layout -> padded kernel layout)
# ---------------------------------------------------------------------------
def _round_up(n, m):
    return ((n + m - 1) // m) * m


def pack_params(w_ih, w_hh, b_ih, b_hh, w_fc, b_fc):
    """PyTorch tensors -> transposed, gate-blocked, 128-lane-padded kernel layout."""
    four_h, _ = w_ih.shape
    H = four_h // 4
    O = w_fc.shape[0]
    HP = _round_up(H, 128)
    OP = _round_up(O, 128)

    def pad_gates(w):  # (4H, K) -> (K, 4*HP), each gate block zero-padded to HP lanes
        K = w.shape[1]
        w4 = w.reshape(4, H, K)
        w4 = jnp.pad(w4, ((0, 0), (0, HP - H), (0, 0)))
        return jnp.transpose(w4, (2, 0, 1)).reshape(K, 4 * HP)

    wih = pad_gates(w_ih)                                      # (D, 4*HP)
    whh = jnp.pad(pad_gates(w_hh), ((0, HP - H), (0, 0)))      # (HP, 4*HP)
    b = jnp.pad((b_ih + b_hh).reshape(4, H),
                ((0, 0), (0, HP - H))).reshape(1, 4 * HP)      # (1, 4*HP)
    wfc = jnp.pad(w_fc.T, ((0, HP - H), (0, OP - O)))          # (HP, OP)
    bfc = jnp.pad(b_fc, (0, OP - O)).reshape(1, OP)            # (1, OP)
    return (wih, whh, b, wfc, bfc)


def init_raw_params(key, input_dim, hidden, output_dim):
    """Deterministic init mimicking PyTorch U(-1/sqrt(H), 1/sqrt(H)), PyTorch layout."""
    k = jax.random.split(key, 6)
    bound = 1.0 / math.sqrt(hidden)
    w_ih = jax.random.uniform(k[0], (4 * hidden, input_dim), jnp.float32, -bound, bound)
    w_hh = jax.random.uniform(k[1], (4 * hidden, hidden), jnp.float32, -bound, bound)
    b_ih = jax.random.uniform(k[2], (4 * hidden,), jnp.float32, -bound, bound)
    b_hh = jax.random.uniform(k[3], (4 * hidden,), jnp.float32, -bound, bound)
    w_fc = jax.random.uniform(k[4], (output_dim, hidden), jnp.float32, -bound, bound)
    b_fc = jax.random.uniform(k[5], (output_dim,), jnp.float32, -bound, bound)
    return (w_ih, w_hh, b_ih, b_hh, w_fc, b_fc)


# ---------------------------------------------------------------------------
# User-facing wrappers
# ---------------------------------------------------------------------------
def lstm_controller_forward(x, hidden, params, *, hidden_size, output_dim):
    """Single step, exactly the PyTorch module forward: x.view(1,1,-1) -> lstm -> fc -> tanh.

    hidden: (h, c) each of shape (1, 1, hidden_size).
    Returns y of shape (1, 1, output_dim) and the new hidden."""
    wih, whh, b, wfc, bfc = params
    D = wih.shape[0]
    HP = whh.shape[0]
    xs = x.reshape(1, 1, D).astype(jnp.float32)
    # Zero-pad the state's HP-H lanes (keeps the padded-lanes-stay-zero invariant).
    h = jnp.pad(hidden[0].reshape(1, hidden_size).astype(jnp.float32),
                ((0, 0), (0, HP - hidden_size)))
    c = jnp.pad(hidden[1].reshape(1, hidden_size).astype(jnp.float32),
                ((0, 0), (0, HP - hidden_size)))
    gx = _project_inputs(xs, wih, b)
    ys, hT, cT = _lstm_unroll_padded(gx, h, c, whh, wfc, bfc)
    y = ys[:, :, :output_dim]                                     # (1, 1, O)
    return y, (hT[:, :hidden_size].reshape(1, 1, hidden_size),
               cT[:, :hidden_size].reshape(1, 1, hidden_size))


def lstm_controller_sequence(xs, hidden, params, *, hidden_size, output_dim,
                             batch_block=None, time_block=None):
    """Fused fast path: T timesteps for B independent controllers in one pallas_call.

    xs: (T, B, input_dim); hidden: (h, c) each (B, hidden_size).
    Returns ys (T, B, output_dim) and final (h, c) each (B, hidden_size)."""
    wih, whh, b, wfc, bfc = params
    HP = whh.shape[0]
    h = jnp.pad(hidden[0].astype(jnp.float32), ((0, 0), (0, HP - hidden_size)))
    c = jnp.pad(hidden[1].astype(jnp.float32), ((0, 0), (0, HP - hidden_size)))
    gx = _project_inputs(xs, wih, b)
    ys, hT, cT = _lstm_unroll_padded(gx, h, c, whh, wfc, bfc,
                                     batch_block=batch_block, time_block=time_block)
    return ys[:, :, :output_dim], (hT[:, :hidden_size], cT[:, :hidden_size])


# ---------------------------------------------------------------------------
# Pure-JAX references
# ---------------------------------------------------------------------------
def reference_step(x, h, c, w_ih, w_hh, b_ih, b_hh, w_fc, b_fc):
    H = h.shape[-1]
    gates = x @ w_ih.T + b_ih + h @ w_hh.T + b_hh
    i_g = jax.nn.sigmoid(gates[..., 0 * H:1 * H])
    f_g = jax.nn.sigmoid(gates[..., 1 * H:2 * H])
    g_g = jnp.tanh(gates[..., 2 * H:3 * H])
    o_g = jax.nn.sigmoid(gates[..., 3 * H:4 * H])
    c_new = f_g * c + i_g * g_g
    h_new = o_g * jnp.tanh(c_new)
    y = jnp.tanh(h_new @ w_fc.T + b_fc)
    return y, h_new, c_new


def reference_sequence(xs, h0, c0, raw):
    def step(carry, x):
        h, c = carry
        y, h, c = reference_step(x, h, c, *raw)
        return (h, c), y
    (hT, cT), ys = jax.lax.scan(step, (h0, c0), xs)
    return ys, hT, cT


# ---------------------------------------------------------------------------
if __name__ == "__main__":
    input_dim, hidden_size, output_dim = 16, 32, 8

    key = jax.random.PRNGKey(0)
    k_w, k_x, k_seq = jax.random.split(key, 3)
    raw = init_raw_params(k_w, input_dim, hidden_size, output_dim)
    params = pack_params(*raw)

    # --- single step, exactly the PyTorch module forward (batch=1, reset() state) ---
    x = jax.random.normal(k_x, (input_dim,), jnp.float32)
    h0 = jnp.zeros((1, 1, hidden_size), jnp.float32)
    c0 = jnp.zeros((1, 1, hidden_size), jnp.float32)
    y, (h1, c1) = lstm_controller_forward(x, (h0, c0), params,
                                          hidden_size=hidden_size,
                                          output_dim=output_dim)
    jax.block_until_ready((y, h1, c1))

    y_ref, h_ref, c_ref = reference_step(x.reshape(1, input_dim),
                                         h0.reshape(1, hidden_size),
                                         c0.reshape(1, hidden_size), *raw)
    assert jnp.allclose(y.reshape(1, -1), y_ref, atol=1e-5)
    assert jnp.allclose(h1.reshape(1, -1), h_ref, atol=1e-5)
    assert jnp.allclose(c1.reshape(1, -1), c_ref, atol=1e-5)

    # --- fused multi-step, batched fast path: grid=(B//BB, T//TS)=(2,4) -----------
    T, B = 32, 16
    xs = jax.random.normal(k_seq, (T, B, input_dim), jnp.float32)
    hb = jnp.zeros((B, hidden_size), jnp.float32)
    cb = jnp.zeros((B, hidden_size), jnp.float32)
    ys, (hT, cT) = lstm_controller_sequence(xs, (hb, cb), params,
                                            hidden_size=hidden_size,
                                            output_dim=output_dim,
                                            batch_block=8, time_block=8)
    jax.block_until_ready((ys, hT, cT))

    ys_ref, hT_ref, cT_ref = reference_sequence(xs, hb, cb, raw)
    assert jnp.allclose(ys, ys_ref, atol=1e-4)
    assert jnp.allclose(hT, hT_ref, atol=1e-4)
    assert jnp.allclose(cT, cT_ref, atol=1e-4)

    print("KERNEL_OK")
</pallas_src>

<mosaic_0001>
module attributes {stable_mosaic.version = 11 : i64} {
  func.func @_lstm_seq_kernel(%arg0: i32, %arg1: i32, %arg2: memref<1x1x512xf32, #tpu.memory_space<vmem>>, %arg3: memref<1x128xf32, #tpu.memory_space<vmem>>, %arg4: memref<1x128xf32, #tpu.memory_space<vmem>>, %arg5: memref<128x512xf32, #tpu.memory_space<vmem>>, %arg6: memref<128x128xf32, #tpu.memory_space<vmem>>, %arg7: memref<1x128xf32, #tpu.memory_space<vmem>>, %arg8: memref<1x1x128xf32, #tpu.memory_space<vmem>>, %arg9: memref<1x128xf32, #tpu.memory_space<vmem>>, %arg10: memref<1x128xf32, #tpu.memory_space<vmem>>) attributes {dimension_semantics = [#tpu.dimension_semantics<parallel>, #tpu.dimension_semantics<arbitrary>], iteration_bounds = array<i64: 1, 1>, scalar_prefetch = 0 : i64, scratch_operands = 0 : i64, tpu.core_type = #tpu.core_type<tc>, window_params = [{transform_indices = @transform_0, window_bounds = array<i64: 1, 1, 512>}, {transform_indices = @transform_1, window_bounds = array<i64: 1, 128>}, {transform_indices = @transform_2, window_bounds = array<i64: 1, 128>}, {pipeline_mode = #tpu.pipeline_mode<synchronous>, transform_indices = @transform_3, window_bounds = array<i64: 128, 512>}, {pipeline_mode = #tpu.pipeline_mode<synchronous>, transform_indices = @transform_4, window_bounds = array<i64: 128, 128>}, {pipeline_mode = #tpu.pipeline_mode<synchronous>, transform_indices = @transform_5, window_bounds = array<i64: 1, 128>}, {transform_indices = @transform_6, window_bounds = array<i64: 1, 1, 128>}, {transform_indices = @transform_7, window_bounds = array<i64: 1, 128>}, {transform_indices = @transform_8, window_bounds = array<i64: 1, 128>}]} {
    %c0_i32 = arith.constant 0 : i32
    %0 = arith.cmpi eq, %arg1, %c0_i32 : i32
    %1 = arith.extui %0 : i1 to i32
    %c0_i32_0 = arith.constant 0 : i32
    %2 = arith.cmpi ne, %1, %c0_i32_0 : i32
    scf.if %2 {
      %c0_29 = arith.constant 0 : index
      %c0_30 = arith.constant 0 : index
      %53 = vector.load %arg3[%c0_29, %c0_30] : memref<1x128xf32, #tpu.memory_space<vmem>>, vector<1x128xf32>
      %c0_31 = arith.constant 0 : index
      %c0_32 = arith.constant 0 : index
      %54 = vector.load %arg9[%c0_31, %c0_32] : memref<1x128xf32, #tpu.memory_space<vmem>>, vector<1x128xf32>
      tpu.vector_store %arg9[%c0_31, %c0_32], %53 {strides = array<i32>} : memref<1x128xf32, #tpu.memory_space<vmem>>, vector<1x128xf32>,
      %c0_33 = arith.constant 0 : index
      %c0_34 = arith.constant 0 : index
      %55 = vector.load %arg4[%c0_33, %c0_34] : memref<1x128xf32, #tpu.memory_space<vmem>>, vector<1x128xf32>
      %c0_35 = arith.constant 0 : index
      %c0_36 = arith.constant 0 : index
      %56 = vector.load %arg10[%c0_35, %c0_36] : memref<1x128xf32, #tpu.memory_space<vmem>>, vector<1x128xf32>
      tpu.vector_store %arg10[%c0_35, %c0_36], %55 {strides = array<i32>} : memref<1x128xf32, #tpu.memory_space<vmem>>, vector<1x128xf32>,
    } else {
    }
    %c0 = arith.constant 0 : index
    %c0_1 = arith.constant 0 : index
    %3 = vector.load %arg5[%c0, %c0_1] : memref<128x512xf32, #tpu.memory_space<vmem>>, vector<128x512xf32>
    %c0_2 = arith.constant 0 : index
    %c0_3 = arith.constant 0 : index
    %4 = vector.load %arg6[%c0_2, %c0_3] : memref<128x128xf32, #tpu.memory_space<vmem>>, vector<128x128xf32>
    %c0_4 = arith.constant 0 : index
    %c0_5 = arith.constant 0 : index
    %5 = vector.load %arg7[%c0_4, %c0_5] : memref<1x128xf32, #tpu.memory_space<vmem>>, vector<1x128xf32>
    %c0_6 = arith.constant 0 : index
    %c0_7 = arith.constant 0 : index
    %6 = vector.load %arg9[%c0_6, %c0_7] : memref<1x128xf32, #tpu.memory_space<vmem>>, vector<1x128xf32>
    %c0_8 = arith.constant 0 : index
    %c0_9 = arith.constant 0 : index
    %7 = vector.load %arg10[%c0_8, %c0_9] : memref<1x128xf32, #tpu.memory_space<vmem>>, vector<1x128xf32>
    %c0_i32_10 = arith.constant 0 : i32
    %8 = arith.index_cast %c0_i32_10 : i32 to index
    %c0_11 = arith.constant 0 : index
    %c0_12 = arith.constant 0 : index
    %9 = vector.load %arg2[%8, %c0_11, %c0_12] : memref<1x1x512xf32, #tpu.memory_space<vmem>>, vector<1x1x512xf32>
    %10 = vector.shape_cast %9 : vector<1x1x512xf32> to vector<1x512xf32>
    %cst = arith.constant dense<0.000000e+00> : vector<1x512xf32>
    %11 = tpu.matmul %6, %3, %cst {dimension_numbers = #tpu.dot_dimension_numbers<[1], [0], [0], [1], [0, 0, 1, 1], [], []>} : vector<1x128xf32>, vector<128x512xf32>, vector<1x512xf32> -> vector<1x512xf32>
    %12 = arith.addf %10, %11 : vector<1x512xf32>
    %13 = vector.extract_strided_slice %12 {offsets = [0, 0], sizes = [1, 128], strides = [1, 1]} : vector<1x512xf32> to vector<1x128xf32>
    %cst_13 = arith.constant 5.000000e-01 : f32
    %14 = vector.broadcast %cst_13 : f32 to vector<1x128xf32>
    %15 = arith.mulf %14, %13 : vector<1x128xf32>
    %16 = math.tanh %15 : vector<1x128xf32>
    %cst_14 = arith.constant 5.000000e-01 : f32
    %17 = vector.broadcast %cst_14 : f32 to vector<1x128xf32>
    %18 = arith.mulf %17, %16 : vector<1x128xf32>
    %cst_15 = arith.constant 5.000000e-01 : f32
    %19 = vector.broadcast %cst_15 : f32 to vector<1x128xf32>
    %20 = arith.addf %18, %19 : vector<1x128xf32>
    %21 = vector.extract_strided_slice %12 {offsets = [0, 128], sizes = [1, 128], strides = [1, 1]} : vector<1x512xf32> to vector<1x128xf32>
    %cst_16 = arith.constant 5.000000e-01 : f32
    %22 = vector.broadcast %cst_16 : f32 to vector<1x128xf32>
    %23 = arith.mulf %22, %21 : vector<1x128xf32>
    %24 = math.tanh %23 : vector<1x128xf32>
    %cst_17 = arith.constant 5.000000e-01 : f32
    %25 = vector.broadcast %cst_17 : f32 to vector<1x128xf32>
    %26 = arith.mulf %25, %24 : vector<1x128xf32>
    %cst_18 = arith.constant 5.000000e-01 : f32
    %27 = vector.broadcast %cst_18 : f32 to vector<1x128xf32>
    %28 = arith.addf %26, %27 : vector<1x128xf32>
    %29 = vector.extract_strided_slice %12 {offsets = [0, 256], sizes = [1, 128], strides = [1, 1]} : vector<1x512xf32> to vector<1x128xf32>
    %30 = math.tanh %29 : vector<1x128xf32>
    %31 = vector.extract_strided_slice %12 {offsets = [0, 384], sizes = [1, 128], strides = [1, 1]} : vector<1x512xf32> to vector<1x128xf32>
    %cst_19 = arith.constant 5.000000e-01 : f32
    %32 = vector.broadcast %cst_19 : f32 to vector<1x128xf32>
    %33 = arith.mulf %32, %31 : vector<1x128xf32>
    %34 = math.tanh %33 : vector<1x128xf32>
    %cst_20 = arith.constant 5.000000e-01 : f32
    %35 = vector.broadcast %cst_20 : f32 to vector<1x128xf32>
    %36 = arith.mulf %35, %34 : vector<1x128xf32>
    %cst_21 = arith.constant 5.000000e-01 : f32
    %37 = vector.broadcast %cst_21 : f32 to vector<1x128xf32>
    %38 = arith.addf %36, %37 : vector<1x128xf32>
    %39 = arith.mulf %28, %7 : vector<1x128xf32>
    %40 = arith.mulf %20, %30 : vector<1x128xf32>
    %41 = arith.addf %39, %40 : vector<1x128xf32>
    %42 = math.tanh %41 : vector<1x128xf32>
    %43 = arith.mulf %38, %42 : vector<1x128xf32>
    %cst_22 = arith.constant dense<0.000000e+00> : vector<1x128xf32>
    %44 = tpu.matmul %43, %4, %cst_22 {dimension_numbers = #tpu.dot_dimension_numbers<[1], [0], [0], [1], [0, 0, 1, 1], [], []>} : vector<1x128xf32>, vector<128x128xf32>, vector<1x128xf32> -> vector<1x128xf32>
    %45 = arith.addf %44, %5 : vector<1x128xf32>
    %46 = math.tanh %45 : vector<1x128xf32>
    %47 = arith.index_cast %c0_i32_10 : i32 to index
    %c0_23 = arith.constant 0 : index
    %c0_24 = arith.constant 0 : index
    %48 = vector.load %arg8[%47, %c0_23, %c0_24] : memref<1x1x128xf32, #tpu.memory_space<vmem>>, vector<1x1x128xf32>
    %49 = vector.shape_cast %48 : vector<1x1x128xf32> to vector<1x128xf32>
    %50 = vector.shape_cast %46 : vector<1x128xf32> to vector<1x1x128xf32>
    tpu.vector_store %arg8[%47, %c0_23, %c0_24], %50 {strides = array<i32>} : memref<1x1x128xf32, #tpu.memory_space<vmem>>, vector<1x1x128xf32>,
    %c1_i32 = arith.constant 1 : i32
    %c0_25 = arith.constant 0 : index
    %c0_26 = arith.constant 0 : index
    %51 = vector.load %arg9[%c0_25, %c0_26] : memref<1x128xf32, #tpu.memory_space<vmem>>, vector<1x128xf32>
    tpu.vector_store %arg9[%c0_25, %c0_26], %43 {strides = array<i32>} : memref<1x128xf32, #tpu.memory_space<vmem>>, vector<1x128xf32>,
    %c0_27 = arith.constant 0 : index
    %c0_28 = arith.constant 0 : index
    %52 = vector.load %arg10[%c0_27, %c0_28] : memref<1x128xf32, #tpu.memory_space<vmem>>, vector<1x128xf32>
    tpu.vector_store %arg10[%c0_27, %c0_28], %41 {strides = array<i32>} : memref<1x128xf32, #tpu.memory_space<vmem>>, vector<1x128xf32>,
    return
  }
  func.func @transform_0(%arg0: i32, %arg1: i32) -> (i32, i32, i32) {
    %c0_i32 = arith.constant 0 : i32
    %c0_i32_0 = arith.constant 0 : i32
    return %arg1, %arg0, %c0_i32 : i32, i32, i32
  }
  func.func @transform_1(%arg0: i32, %arg1: i32) -> (i32, i32) {
    %c0_i32 = arith.constant 0 : i32
    %c0_i32_0 = arith.constant 0 : i32
    return %arg0, %c0_i32 : i32, i32
  }
  func.func @transform_2(%arg0: i32, %arg1: i32) -> (i32, i32) {
    %c0_i32 = arith.constant 0 : i32
    %c0_i32_0 = arith.constant 0 : i32
    return %arg0, %c0_i32 : i32, i32
  }
  func.func @transform_3(%arg0: i32, %arg1: i32) -> (i32, i32) {
    %c0_i32 = arith.constant 0 : i32
    %c0_i32_0 = arith.constant 0 : i32
    %c0_i32_1 = arith.constant 0 : i32
    return %c0_i32, %c0_i32_0 : i32, i32
  }
  func.func @transform_4(%arg0: i32, %arg1: i32) -> (i32, i32) {
    %c0_i32 = arith.constant 0 : i32
    %c0_i32_0 = arith.constant 0 : i32
    %c0_i32_1 = arith.constant 0 : i32
    return %c0_i32, %c0_i32_0 : i32, i32
  }
  func.func @transform_5(%arg0: i32, %arg1: i32) -> (i32, i32) {
    %c0_i32 = arith.constant 0 : i32
    %c0_i32_0 = arith.constant 0 : i32
    %c0_i32_1 = arith.constant 0 : i32
    return %c0_i32, %c0_i32_0 : i32, i32
  }
  func.func @transform_6(%arg0: i32, %arg1: i32) -> (i32, i32, i32) {
    %c0_i32 = arith.constant 0 : i32
    %c0_i32_0 = arith.constant 0 : i32
    return %arg1, %arg0, %c0_i32 : i32, i32, i32
  }
  func.func @transform_7(%arg0: i32, %arg1: i32) -> (i32, i32) {
    %c0_i32 = arith.constant 0 : i32
    %c0_i32_0 = arith.constant 0 : i32
    return %arg0, %c0_i32 : i32, i32
  }
  func.func @transform_8(%arg0: i32, %arg1: i32) -> (i32, i32) {
    %c0_i32 = arith.constant 0 : i32
    %c0_i32_0 = arith.constant 0 : i32
    return %arg0, %c0_i32 : i32, i32
  }
}

</mosaic_0001>

<llo_original>
// kernel: tpu_custom_call.1
$region0: #{tpu_custom_call.1}
  #allocation0 [shape = 'u32[]', space=smem, size = 0x4, offset = 0x4, fixed_abs, tag = 'smem constant byte address 0x4 - core index']
  #allocation1 [shape = 'u32[144,128]{1,0:T(1,128)}', space=vmem, size = 0x12000, scoped, tag = 'internal scratch']
  %s0 = inlined_call_operand.hbm [shape: f32[1,1,512], index: 0, kind: input, shape index: {}]
  %s1 = inlined_call_operand.vmem [shape: f32[1,128], index: 1, kind: input, shape index: {}]
  %s2 = inlined_call_operand.vmem [shape: f32[1,128], index: 2, kind: input, shape index: {}]
  %s3 = inlined_call_operand.hbm [shape: f32[128,512], index: 3, kind: input, shape index: {}]
  %s4 = inlined_call_operand.hbm [shape: f32[128,128], index: 4, kind: input, shape index: {}]
  %s5 = inlined_call_operand.vmem [shape: f32[1,128], index: 5, kind: input, shape index: {}]
  %s6 = inlined_call_operand.hbm [shape: f32[1,1,128], index: 6, kind: output, shape index: {0}]
  %s7 = inlined_call_operand.hbm [shape: f32[1,128], index: 7, kind: output, shape index: {1}]
  %s8 = inlined_call_operand.hbm [shape: f32[1,128], index: 8, kind: output, shape index: {2}]
  %9 = xla_tuple %s6, %s7, %s8
  %s10 = sld [smem:[#allocation0]]
  $region66: #{tpu_custom_call.1} parent=0
    _
  %s12 = ssub.s32 1, %s10
  %s13 = scalar_select 0, %s12, %s10
  $region1: #{tpu_custom_call.1} parent=0
    #allocation2 [shape = 'u8[2048]{0}', space=vmem, size = 0x800, scoped, tag = 'input window, operand 0, single buffered']
    #allocation3 [shape = 's32[1]{0}', space=sflag, size = 0x4, scoped, tag = 'scoped memory for tpu_custom_call.1']
    #allocation4 [shape = 's32[1]{0}', space=sflag, size = 0x4, scoped, tag = 'scoped memory for tpu_custom_call.1']
    #allocation5 [shape = 'u8[262144]{0}', space=vmem, size = 0x40000, scoped, tag = 'input window, operand 3, single buffered']
    #allocation6 [shape = 's32[1]{0}', space=sflag, size = 0x4, scoped, tag = 'scoped memory for tpu_custom_call.1']
    #allocation7 [shape = 'u8[65536]{0}', space=vmem, size = 0x10000, scoped, tag = 'input window, operand 4, single buffered']
    #allocation8 [shape = 'u8[512]{0}', space=vmem, size = 0x400, scoped, tag = 'output window, operand 0, single buffered']
    #allocation9 [shape = 'u8[512]{0}', space=vmem, size = 0x400, scoped, tag = 'output window, operand 1, single buffered']
    #allocation10 [shape = 's32[1]{0}', space=sflag, size = 0x4, scoped, tag = 'scoped memory for tpu_custom_call.1']
    #allocation11 [shape = 'u8[512]{0}', space=vmem, size = 0x400, scoped, tag = 'output window, operand 2, single buffered']
    %14 = vsyncpa [#allocation3], 0
    %15 = vsyncpa [#allocation6], 0
    %16 = vsyncpa [#allocation4], 0
    %17 = vsyncpa [#allocation10], 0
    // Predicated region
    $region2: #{tpu_custom_call.1} parent=1 // pred_check
      _
    $region3: #{tpu_custom_call.1} parent=1 // pred_check_branch
      %19 = sbr.rel (0) target = $region5
    $region4: #{tpu_custom_call.1} parent=1 // pred_region
      %s21 = ssub.s32 64, 64
      %22 = vsyncadd [#allocation3], %s21
      %s24 = sshll.u32 [#allocation2], 4
      %s25 = int_to_ptr.vmem [resolvable:$true] %s24
      %27 = dma.hbm_to_vmem [thread:$0]  %s0, 64, %s25, [#allocation3]
    $region5: #{tpu_custom_call.1} parent=1 // pred_fallthru
      _
    // Predicated region
    $region6: #{tpu_custom_call.1} parent=1 // pred_check
      _
    $region7: #{tpu_custom_call.1} parent=1 // pred_check_branch
      %29 = sbr.rel (0) target = $region9
    $region8: #{tpu_custom_call.1} parent=1 // pred_region
      _
    $region9: #{tpu_custom_call.1} parent=1 // pred_fallthru
      _
    // Predicated region
    $region10: #{tpu_custom_call.1} parent=1 // pred_check
      _
    $region11: #{tpu_custom_call.1} parent=1 // pred_check_branch
      %31 = sbr.rel (0) target = $region13
    $region12: #{tpu_custom_call.1} parent=1 // pred_region
      _
    $region13: #{tpu_custom_call.1} parent=1 // pred_fallthru
      _
    // Predicated region
    $region14: #{tpu_custom_call.1} parent=1 // pred_check
      _
    $region15: #{tpu_custom_call.1} parent=1 // pred_check_branch
      %33 = sbr.rel (0) target = $region17
    $region16: #{tpu_custom_call.1} parent=1 // pred_region
      %s35 = ssub.s32 8192, 8192
      %36 = vsyncadd [#allocation6], %s35
      %s37 = sshll.u32 [#allocation5], 4
      %s38 = int_to_ptr.vmem [resolvable:$true] %s37
      %43 = dma.hbm_to_vmem [thread:$0]  %s3, 8192, %s38, [#allocation6], 512, 512, 32
    $region17: #{tpu_custom_call.1} parent=1 // pred_fallthru
      _
    // Predicated region
    $region18: #{tpu_custom_call.1} parent=1 // pred_check
      _
    $region19: #{tpu_custom_call.1} parent=1 // pred_check_branch
      %45 = sbr.rel (0) target = $region21
    $region20: #{tpu_custom_call.1} parent=1 // pred_region
      %s47 = ssub.s32 2048, 2048
      %48 = vsyncadd [#allocation6], %s47
      %s49 = sshll.u32 [#allocation7], 4
      %s50 = int_to_ptr.vmem [resolvable:$true] %s49
      %55 = dma.hbm_to_vmem [thread:$0]  %s4, 2048, %s50, [#allocation6], 128, 128, 8
    $region21: #{tpu_custom_call.1} parent=1 // pred_fallthru
      _
    // Predicated region
    $region22: #{tpu_custom_call.1} parent=1 // pred_check
      _
    $region23: #{tpu_custom_call.1} parent=1 // pred_check_branch
      %57 = sbr.rel (0) target = $region25
    $region24: #{tpu_custom_call.1} parent=1 // pred_region
      _
    $region25: #{tpu_custom_call.1} parent=1 // pred_fallthru
      _
    // Predicated region
    $region26: #{tpu_custom_call.1} parent=1 // pred_check
      _
    $region27: #{tpu_custom_call.1} parent=1 // pred_check_branch
      %59 = sbr.rel (0) target = $region29
    $region28: #{tpu_custom_call.1} parent=1 // pred_region
      %60 = dma.done [#allocation3], 64
    $region29: #{tpu_custom_call.1} parent=1 // pred_fallthru
      _
    // Predicated region
    $region30: #{tpu_custom_call.1} parent=1 // pred_check
      _
    $region31: #{tpu_custom_call.1} parent=1 // pred_check_branch
      %62 = sbr.rel (0) target = $region33
    $region32: #{tpu_custom_call.1} parent=1 // pred_region
      %63 = dma.done [#allocation6], 8192
    $region33: #{tpu_custom_call.1} parent=1 // pred_fallthru
      _
    // Predicated region
    $region34: #{tpu_custom_call.1} parent=1 // pred_check
      _
    $region35: #{tpu_custom_call.1} parent=1 // pred_check_branch
      %65 = sbr.rel (0) target = $region37
    $region36: #{tpu_custom_call.1} parent=1 // pred_region
      %66 = dma.done [#allocation6], 2048
    $region37: #{tpu_custom_call.1} parent=1 // pred_fallthru
      _
    %p67 = scmp.eq.s32.totalorder 0, 0
    // Predicated region
    $region38: #{tpu_custom_call.1} parent=1 // pred_check
      %p68 = pneg %p67
    $region39: #{tpu_custom_call.1} parent=1 // pred_check_branch
      %70 = sbr.rel (%p68) target = $region41
    $region40: #{tpu_custom_call.1} parent=1 // pred_region
      %v71 = vld [vmem:[%s1] sm:$0x1]
      %72 = vst [vmem:[#allocation9] sm:$0x1] %v71
      %v73 = vld [vmem:[%s2] sm:$0x1]
      %74 = vst [vmem:[#allocation11] sm:$0x1] %v73
    $region41: #{tpu_custom_call.1} parent=1 // pred_fallthru
      _
    %v75 = vld [vmem:[#allocation5] sm:$0xff]
    %v76 = vld [vmem:[#allocation5 + $0x8] sm:$0xff]
    %v77 = vld [vmem:[#allocation5 + $0x10] sm:$0xff]
    %v78 = vld [vmem:[#allocation5 + $0x18] sm:$0xff]
    %v79 = vld [vmem:[#allocation5 + $0x20] sm:$0xff]
    %v80 = vld [vmem:[#allocation5 + $0x28] sm:$0xff]
    %v81 = vld [vmem:[#allocation5 + $0x30] sm:$0xff]
    %v82 = vld [vmem:[#allocation5 + $0x38] sm:$0xff]
    %v83 = vld [vmem:[#allocation5 + $0x40] sm:$0xff]
    %v84 = vld [vmem:[#allocation5 + $0x48] sm:$0xff]
    %v85 = vld [vmem:[#allocation5 + $0x50] sm:$0xff]
    %v86 = vld [vmem:[#allocation5 + $0x58] sm:$0xff]
    %v87 = vld [vmem:[#allocation5 + $0x60] sm:$0xff]
    %v88 = vld [vmem:[#allocation5 + $0x68] sm:$0xff]
    %v89 = vld [vmem:[#allocation5 + $0x70] sm:$0xff]
    %v90 = vld [vmem:[#allocation5 + $0x78] sm:$0xff]
    %v91 = vld [vmem:[#allocation5 + $0x80] sm:$0xff]
    %v92 = vld [vmem:[#allocation5 + $0x88] sm:$0xff]
    %v93 = vld [vmem:[#allocation5 + $0x90] sm:$0xff]
    %v94 = vld [vmem:[#allocation5 + $0x98] sm:$0xff]
    %v95 = vld [vmem:[#allocation5 + $0xa0] sm:$0xff]
    %v96 = vld [vmem:[#allocation5 + $0xa8] sm:$0xff]
    %v97 = vld [vmem:[#allocation5 + $0xb0] sm:$0xff]
    %v98 = vld [vmem:[#allocation5 + $0xb8] sm:$0xff]
    %v99 = vld [vmem:[#allocation5 + $0xc0] sm:$0xff]
    %v100 = vld [vmem:[#allocation5 + $0xc8] sm:$0xff]
    %v101 = vld [vmem:[#allocation5 + $0xd0] sm:$0xff]
    %v102 = vld [vmem:[#allocation5 + $0xd8] sm:$0xff]
    %v103 = vld [vmem:[#allocation5 + $0xe0] sm:$0xff]
    %v104 = vld [vmem:[#allocation5 + $0xe8] sm:$0xff]
    %v105 = vld [vmem:[#allocation5 + $0xf0] sm:$0xff]
    %v106 = vld [vmem:[#allocation5 + $0xf8] sm:$0xff]
    %v107 = vld [vmem:[#allocation5 + $0x100] sm:$0xff]
    %v108 = vld [vmem:[#allocation5 + $0x108] sm:$0xff]
    %v109 = vld [vmem:[#allocation5 + $0x110] sm:$0xff]
    %v110 = vld [vmem:[#allocation5 + $0x118] sm:$0xff]
    %v111 = vld [vmem:[#allocation5 + $0x120] sm:$0xff]
    %v112 = vld [vmem:[#allocation5 + $0x128] sm:$0xff]
    %v113 = vld [vmem:[#allocation5 + $0x130] sm:$0xff]
    %v114 = vld [vmem:[#allocation5 + $0x138] sm:$0xff]
    %v115 = vld [vmem:[#allocation5 + $0x140] sm:$0xff]
    %v116 = vld [vmem:[#allocation5 + $0x148] sm:$0xff]
    %v117 = vld [vmem:[#allocation5 + $0x150] sm:$0xff]
    %v118 = vld [vmem:[#allocation5 + $0x158] sm:$0xff]
    %v119 = vld [vmem:[#allocation5 + $0x160] sm:$0xff]
    %v120 = vld [vmem:[#allocation5 + $0x168] sm:$0xff]
    %v121 = vld [vmem:[#allocation5 + $0x170] sm:$0xff]
    %v122 = vld [vmem:[#allocation5 + $0x178] sm:$0xff]
    %v123 = vld [vmem:[#allocation5 + $0x180] sm:$0xff]
    %v124 = vld [vmem:[#allocation5 + $0x188] sm:$0xff]
    %v125 = vld [vmem:[#allocation5 + $0x190] sm:$0xff]
    %v126 = vld [vmem:[#allocation5 + $0x198] sm:$0xff]
    %v127 = vld [vmem:[#allocation5 + $0x1a0] sm:$0xff]
    %v128 = vld [vmem:[#allocation5 + $0x1a8] sm:$0xff]
    %v129 = vld [vmem:[#allocation5 + $0x1b0] sm:$0xff]
    %v130 = vld [vmem:[#allocation5 + $0x1b8] sm:$0xff]
    %v131 = vld [vmem:[#allocation5 + $0x1c0] sm:$0xff]
    %v132 = vld [vmem:[#allocation5 + $0x1c8] sm:$0xff]
    %v133 = vld [vmem:[#allocation5 + $0x1d0] sm:$0xff]
    %v134 = vld [vmem:[#allocation5 + $0x1d8] sm:$0xff]
    %v135 = vld [vmem:[#allocation5 + $0x1e0] sm:$0xff]
    %v136 = vld [vmem:[#allocation5 + $0x1e8] sm:$0xff]
    %v137 = vld [vmem:[#allocation5 + $0x1f0] sm:$0xff]
    %v138 = vld [vmem:[#allocation5 + $0x1f8] sm:$0xff]
    %v139 = vld [vmem:[#allocation7] sm:$0xff]
    %v140 = vld [vmem:[#allocation7 + $0x8] sm:$0xff]
    %v141 = vld [vmem:[#allocation7 + $0x10] sm:$0xff]
    %v142 = vld [vmem:[#allocation7 + $0x18] sm:$0xff]
    %v143 = vld [vmem:[#allocation7 + $0x20] sm:$0xff]
    %v144 = vld [vmem:[#allocation7 + $0x28] sm:$0xff]
    %v145 = vld [vmem:[#allocation7 + $0x30] sm:$0xff]
    %v146 = vld [vmem:[#allocation7 + $0x38] sm:$0xff]
    %v147 = vld [vmem:[#allocation7 + $0x40] sm:$0xff]
    %v148 = vld [vmem:[#allocation7 + $0x48] sm:$0xff]
    %v149 = vld [vmem:[#allocation7 + $0x50] sm:$0xff]
    %v150 = vld [vmem:[#allocation7 + $0x58] sm:$0xff]
    %v151 = vld [vmem:[#allocation7 + $0x60] sm:$0xff]
    %v152 = vld [vmem:[#allocation7 + $0x68] sm:$0xff]
    %v153 = vld [vmem:[#allocation7 + $0x70] sm:$0xff]
    %v154 = vld [vmem:[#allocation7 + $0x78] sm:$0xff]
    %v155 = vld [vmem:[%s5] sm:$0x1]
    %v156 = vld [vmem:[#allocation9] sm:$0x1]
    %v157 = vld [vmem:[#allocation11] sm:$0x1]
    %v158 = vld [vmem:[#allocation2] sm:$0xf]
    %159 = vmatprep.subr.mxu0 %v76
    %160 = vmatpush1.msra.mxu0 %v75
    %161 = vmatprep.subr.mxu0 %v80
    %162 = vmatpush1.msra.mxu0 %v79
    %163 = vmatprep.subr.mxu0 %v84
    %164 = vmatpush1.msra.mxu0 %v83
    %165 = vmatprep.subr.mxu0 %v88
    %166 = vmatpush1.msra.mxu0 %v87
    %167 = vmatprep.subr.mxu0 %v92
    %168 = vmatpush1.msra.mxu0 %v91
    %169 = vmatprep.subr.mxu0 %v96
    %170 = vmatpush1.msra.mxu0 %v95
    %171 = vmatprep.subr.mxu0 %v100
    %172 = vmatpush1.msra.mxu0 %v99
    %173 = vmatprep.subr.mxu0 %v104
    %174 = vmatpush1.msra.mxu0 %v103
    %175 = vmatprep.subr.mxu0 %v108
    %176 = vmatpush1.msra.mxu0 %v107
    %177 = vmatprep.subr.mxu0 %v112
    %178 = vmatpush1.msra.mxu0 %v111
    %179 = vmatprep.subr.mxu0 %v116
    %180 = vmatpush1.msra.mxu0 %v115
    %181 = vmatprep.subr.mxu0 %v120
    %182 = vmatpush1.msra.mxu0 %v119
    %183 = vmatprep.subr.mxu0 %v124
    %184 = vmatpush1.msra.mxu0 %v123
    %185 = vmatprep.subr.mxu0 %v128
    %186 = vmatpush1.msra.mxu0 %v127
    %187 = vmatprep.subr.mxu0 %v132
    %188 = vmatpush1.msra.mxu0 %v131
    %189 = vmatprep.subr.mxu0 %v136
    %190 = vmatpush1.msra.mxu0 %v135
    %191 = vmatprep.subr.mxu0 0.0
    %192 = vmatpush1.msra.mxu0 0.0
    %193 = vmatprep.subr.mxu0 0.0
    %194 = vmatpush1.msra.mxu0 0.0
    %195 = vmatprep.subr.mxu0 0.0
    %196 = vmatpush1.msra.mxu0 0.0
    %197 = vmatprep.subr.mxu0 0.0
    %198 = vmatpush1.msra.mxu0 0.0
    %199 = vmatprep.subr.mxu0 0.0
    %200 = vmatpush1.msra.mxu0 0.0
    %201 = vmatprep.subr.mxu0 0.0
    %202 = vmatpush1.msra.mxu0 0.0
    %203 = vmatprep.subr.mxu0 0.0
    %204 = vmatpush1.msra.mxu0 0.0
    %205 = vmatprep.subr.mxu0 0.0
    %206 = vmatpush1.msra.mxu0 0.0
    %207 = vmatprep.subr.mxu0 0.0
    %208 = vmatpush1.msra.mxu0 0.0
    %209 = vmatprep.subr.mxu0 0.0
    %210 = vmatpush1.msra.mxu0 0.0
    %211 = vmatprep.subr.mxu0 0.0
    %212 = vmatpush1.msra.mxu0 0.0
    %213 = vmatprep.subr.mxu0 0.0
    %214 = vmatpush1.msra.mxu0 0.0
    %215 = vmatprep.subr.mxu0 0.0
    %216 = vmatpush1.msra.mxu0 0.0
    %217 = vmatprep.subr.mxu0 0.0
    %218 = vmatpush1.msra.mxu0 0.0
    %219 = vmatprep.subr.mxu0 0.0
    %220 = vmatpush1.msra.mxu0 0.0
    %221 = vmatprep.subr.mxu0 0.0
    %222 = vmatpush1.msra.mxu0 0.0
    %223 = vmatprep.mubr.f32.mxu0 0.0
    %224 = vmatmul.mubr.f32.gmra.mrb[0].mxu0 %v156
    %v225 = vpop.f32.mrb[0].mxu0
    %v226 = vadd.f32 0.0, %v225
    %v227 = vpop.f32.mrb[0].mxu0
    %v228 = vadd.f32 0.0, %v227
    %229 = vdwg.mxu0
    %230 = vmatprep.subr.mxu0 %v78
    %231 = vmatpush1.msra.mxu0 %v77
    %232 = vmatprep.subr.mxu0 %v82
    %233 = vmatpush1.msra.mxu0 %v81
    %234 = vmatprep.subr.mxu0 %v86
    %235 = vmatpush1.msra.mxu0 %v85
    %236 = vmatprep.subr.mxu0 %v90
    %237 = vmatpush1.msra.mxu0 %v89
    %238 = vmatprep.subr.mxu0 %v94
    %239 = vmatpush1.msra.mxu0 %v93
    %240 = vmatprep.subr.mxu0 %v98
    %241 = vmatpush1.msra.mxu0 %v97
    %242 = vmatprep.subr.mxu0 %v102
    %243 = vmatpush1.msra.mxu0 %v101
    %244 = vmatprep.subr.mxu0 %v106
    %245 = vmatpush1.msra.mxu0 %v105
    %246 = vmatprep.subr.mxu0 %v110
    %247 = vmatpush1.msra.mxu0 %v109
    %248 = vmatprep.subr.mxu0 %v114
    %249 = vmatpush1.msra.mxu0 %v113
    %250 = vmatprep.subr.mxu0 %v118
    %251 = vmatpush1.msra.mxu0 %v117
    %252 = vmatprep.subr.mxu0 %v122
    %253 = vmatpush1.msra.mxu0 %v121
    %254 = vmatprep.subr.mxu0 %v126
    %255 = vmatpush1.msra.mxu0 %v125
    %256 = vmatprep.subr.mxu0 %v130
    %257 = vmatpush1.msra.mxu0 %v129
    %258 = vmatprep.subr.mxu0 %v134
    %259 = vmatpush1.msra.mxu0 %v133
    %260 = vmatprep.subr.mxu0 %v138
    %261 = vmatpush1.msra.mxu0 %v137
    %262 = vmatprep.subr.mxu0 0.0
    %263 = vmatpush1.msra.mxu0 0.0
    %264 = vmatprep.subr.mxu0 0.0
    %265 = vmatpush1.msra.mxu0 0.0
    %266 = vmatprep.subr.mxu0 0.0
    %267 = vmatpush1.msra.mxu0 0.0
    %268 = vmatprep.subr.mxu0 0.0
    %269 = vmatpush1.msra.mxu0 0.0
    %270 = vmatprep.subr.mxu0 0.0
    %271 = vmatpush1.msra.mxu0 0.0
    %272 = vmatprep.subr.mxu0 0.0
    %273 = vmatpush1.msra.mxu0 0.0
    %274 = vmatprep.subr.mxu0 0.0
    %275 = vmatpush1.msra.mxu0 0.0
    %276 = vmatprep.subr.mxu0 0.0
    %277 = vmatpush1.msra.mxu0 0.0
    %278 = vmatprep.subr.mxu0 0.0
    %279 = vmatpush1.msra.mxu0 0.0
    %280 = vmatprep.subr.mxu0 0.0
    %281 = vmatpush1.msra.mxu0 0.0
    %282 = vmatprep.subr.mxu0 0.0
    %283 = vmatpush1.msra.mxu0 0.0
    %284 = vmatprep.subr.mxu0 0.0
    %285 = vmatpush1.msra.mxu0 0.0
    %286 = vmatprep.subr.mxu0 0.0
    %287 = vmatpush1.msra.mxu0 0.0
    %288 = vmatprep.subr.mxu0 0.0
    %289 = vmatpush1.msra.mxu0 0.0
    %290 = vmatprep.subr.mxu0 0.0
    %291 = vmatpush1.msra.mxu0 0.0
    %292 = vmatprep.subr.mxu0 0.0
    %293 = vmatpush1.msra.mxu0 0.0
    %294 = vmatprep.mubr.f32.mxu0 0.0
    %295 = vmatmul.mubr.f32.gmra.mrb[0].mxu0 %v156
    %v296 = vpop.f32.mrb[0].mxu0
    %v297 = vadd.f32 0.0, %v296
    %v298 = vpop.f32.mrb[0].mxu0
    %v299 = vadd.f32 0.0, %v298
    %300 = vdwg.mxu0
    %v305 = vcombine.low %v226, %v228
    %v306 = vcombine.low %v297, %v299
    %v308 = vunpack.c.l.s4 1966171168
    %v309 = vunpack.c.0.s8 %v308
    %v310 = vlaneseq
    %v311 = vshrl.u32 %v310, 7
    %v312 = vsub.s32 %v309, %v311
    %v313 = vrot.slane %v305, %v312
    %v315 = vunpack.c.l.s4 1966171168
    %v316 = vunpack.c.0.s8 %v315
    %v317 = vlaneseq
    %v318 = vshrl.u32 %v317, 7
    %v319 = vsub.s32 %v316, %v318
    %v320 = vrot.slane %v306, %v319
    %v321 = vcombine.low %v313, %v320
    %v323 = vunpack.c.l.s4 1966171168
    %v324 = vunpack.c.0.s8 %v323
    %v325 = vlaneseq
    %v326 = vshrl.u32 %v325, 7
    %v327 = vsub.s32 %v324, %v326
    %v328 = vrot.slane %v321, %v327
    %v330 = vadd.f32 %v158, %v328
    %v331 = vmul.f32 %v330, 0.5
    %v332 = vtanh.pop %v331
    %v333 = vmul.f32 %v332, 0.5
    %v334 = vadd.f32 %v333, 0.5
    %v336 = vrot.slane %v330, 1
    %v338 = vmul.f32 %v336, 0.5
    %v339 = vtanh.pop %v338
    %v340 = vmul.f32 %v339, 0.5
    %v341 = vadd.f32 %v340, 0.5
    %v342 = vrot.slane %v330, 2
    %v344 = vtanh.pop %v342
    %v345 = vrot.slane %v330, 3
    %v347 = vmul.f32 %v345, 0.5
    %v348 = vtanh.pop %v347
    %v349 = vmul.f32 %v348, 0.5
    %v350 = vadd.f32 %v349, 0.5
    %v351 = vmul.f32 %v341, %v157
    %v352 = vmul.f32 %v334, %v344
    %v353 = vadd.f32 %v351, %v352
    %v354 = vtanh.pop %v353
    %v355 = vmul.f32 %v350, %v354
    %356 = vmatprep.subr.mxu0 0.0
    %357 = vmatpush1.msra.mxu0 %v139
    %358 = vmatprep.subr.mxu0 0.0
    %359 = vmatpush1.msra.mxu0 %v140
    %360 = vmatprep.subr.mxu0 0.0
    %361 = vmatpush1.msra.mxu0 %v141
    %362 = vmatprep.subr.mxu0 0.0
    %363 = vmatpush1.msra.mxu0 %v142
    %364 = vmatprep.subr.mxu0 0.0
    %365 = vmatpush1.msra.mxu0 %v143
    %366 = vmatprep.subr.mxu0 0.0
    %367 = vmatpush1.msra.mxu0 %v144
    %368 = vmatprep.subr.mxu0 0.0
    %369 = vmatpush1.msra.mxu0 %v145
    %370 = vmatprep.subr.mxu0 0.0
    %371 = vmatpush1.msra.mxu0 %v146
    %372 = vmatprep.subr.mxu0 0.0
    %373 = vmatpush1.msra.mxu0 %v147
    %374 = vmatprep.subr.mxu0 0.0
    %375 = vmatpush1.msra.mxu0 %v148
    %376 = vmatprep.subr.mxu0 0.0
    %377 = vmatpush1.msra.mxu0 %v149
    %378 = vmatprep.subr.mxu0 0.0
    %379 = vmatpush1.msra.mxu0 %v150
    %380 = vmatprep.subr.mxu0 0.0
    %381 = vmatpush1.msra.mxu0 %v151
    %382 = vmatprep.subr.mxu0 0.0
    %383 = vmatpush1.msra.mxu0 %v152
    %384 = vmatprep.subr.mxu0 0.0
    %385 = vmatpush1.msra.mxu0 %v153
    %386 = vmatprep.subr.mxu0 0.0
    %387 = vmatpush1.msra.mxu0 %v154
    %388 = vmatprep.subr.mxu0 0.0
    %389 = vmatpush1.msra.mxu0 0.0
    %390 = vmatprep.subr.mxu0 0.0
    %391 = vmatpush1.msra.mxu0 0.0
    %392 = vmatprep.subr.mxu0 0.0
    %393 = vmatpush1.msra.mxu0 0.0
    %394 = vmatprep.subr.mxu0 0.0
    %395 = vmatpush1.msra.mxu0 0.0
    %396 = vmatprep.subr.mxu0 0.0
    %397 = vmatpush1.msra.mxu0 0.0
    %398 = vmatprep.subr.mxu0 0.0
    %399 = vmatpush1.msra.mxu0 0.0
    %400 = vmatprep.subr.mxu0 0.0
    %401 = vmatpush1.msra.mxu0 0.0
    %402 = vmatprep.subr.mxu0 0.0
    %403 = vmatpush1.msra.mxu0 0.0
    %404 = vmatprep.subr.mxu0 0.0
    %405 = vmatpush1.msra.mxu0 0.0
    %406 = vmatprep.subr.mxu0 0.0
    %407 = vmatpush1.msra.mxu0 0.0
    %408 = vmatprep.subr.mxu0 0.0
    %409 = vmatpush1.msra.mxu0 0.0
    %410 = vmatprep.subr.mxu0 0.0
    %411 = vmatpush1.msra.mxu0 0.0
    %412 = vmatprep.subr.mxu0 0.0
    %413 = vmatpush1.msra.mxu0 0.0
    %414 = vmatprep.subr.mxu0 0.0
    %415 = vmatpush1.msra.mxu0 0.0
    %416 = vmatprep.subr.mxu0 0.0
    %417 = vmatpush1.msra.mxu0 0.0
    %418 = vmatprep.subr.mxu0 0.0
    %419 = vmatpush1.msra.mxu0 0.0
    %420 = vmatprep.mubr.f32.mxu0 0.0
    %421 = vmatmul.mubr.f32.gmra.mrb[0].mxu0 %v355
    %v422 = vpop.f32.mrb[0].mxu0
    %v423 = vadd.f32 %v155, %v422
    %v424 = vpop.f32.mrb[0].mxu0
    %425 = vdwg.mxu0
    %v426 = vtanh.pop %v423
    %427 = vst [vmem:[#allocation8] sm:$0x1] %v426
    %428 = vst [vmem:[#allocation9] sm:$0x1] %v355
    %429 = vst [vmem:[#allocation11] sm:$0x1] %v353
    // Predicated region
    $region42: #{tpu_custom_call.1} parent=1 // pred_check
      _
    $region43: #{tpu_custom_call.1} parent=1 // pred_check_branch
      %431 = sbr.rel (0) target = $region45
    $region44: #{tpu_custom_call.1} parent=1 // pred_region
      %s433 = ssub.s32 16, 16
      %434 = vsyncadd [#allocation4], %s433
      %s436 = sshll.u32 [#allocation8], 4
      %s437 = int_to_ptr.vmem [resolvable:$true] %s436
      %439 = dma.vmem_to_hbm [thread:$0]  %s437, 16, %s6, [#allocation4]
    $region45: #{tpu_custom_call.1} parent=1 // pred_fallthru
      _
    // Predicated region
    $region46: #{tpu_custom_call.1} parent=1 // pred_check
      _
    $region47: #{tpu_custom_call.1} parent=1 // pred_check_branch
      %441 = sbr.rel (0) target = $region49
    $region48: #{tpu_custom_call.1} parent=1 // pred_region
      %s443 = ssub.s32 16, 16
      %444 = vsyncadd [#allocation10], %s443
      %s446 = sshll.u32 [#allocation9], 4
      %s447 = int_to_ptr.vmem [resolvable:$true] %s446
      %449 = dma.vmem_to_hbm [thread:$0]  %s447, 16, %s7, [#allocation10]
    $region49: #{tpu_custom_call.1} parent=1 // pred_fallthru
      _
    // Predicated region
    $region50: #{tpu_custom_call.1} parent=1 // pred_check
      _
    $region51: #{tpu_custom_call.1} parent=1 // pred_check_branch
      %451 = sbr.rel (0) target = $region53
    $region52: #{tpu_custom_call.1} parent=1 // pred_region
      %s453 = ssub.s32 16, 16
      %454 = vsyncadd [#allocation10], %s453
      %s456 = sshll.u32 [#allocation11], 4
      %s457 = int_to_ptr.vmem [resolvable:$true] %s456
      %459 = dma.vmem_to_hbm [thread:$0]  %s457, 16, %s8, [#allocation10]
    $region53: #{tpu_custom_call.1} parent=1 // pred_fallthru
      _
    // Predicated region
    $region54: #{tpu_custom_call.1} parent=1 // pred_check
      _
    $region55: #{tpu_custom_call.1} parent=1 // pred_check_branch
      %461 = sbr.rel (0) target = $region57
    $region56: #{tpu_custom_call.1} parent=1 // pred_region
      %462 = dma.done [#allocation4], 16
    $region57: #{tpu_custom_call.1} parent=1 // pred_fallthru
      _
    // Predicated region
    $region58: #{tpu_custom_call.1} parent=1 // pred_check
      _
    $region59: #{tpu_custom_call.1} parent=1 // pred_check_branch
      %464 = sbr.rel (0) target = $region61
    $region60: #{tpu_custom_call.1} parent=1 // pred_region
      %465 = dma.done [#allocation10], 16
    $region61: #{tpu_custom_call.1} parent=1 // pred_fallthru
      _
    // Predicated region
    $region62: #{tpu_custom_call.1} parent=1 // pred_check
      _
    $region63: #{tpu_custom_call.1} parent=1 // pred_check_branch
      %467 = sbr.rel (0) target = $region65
    $region64: #{tpu_custom_call.1} parent=1 // pred_region
      %468 = dma.done [#allocation10], 16
    $region65: #{tpu_custom_call.1} parent=1 // pred_fallthru
      _
    %469 = vsyncpa [#allocation3], 1
    %470 = vsyncpa [#allocation6], 1
    %471 = vsyncpa [#allocation4], 1
    %472 = vsyncpa [#allocation10], 1

</llo_original>
